<compile_context>
chip_gen: v7x
topology: tpu7x:2x2x1
jax: 0.10.0
libtpu: 0.0.40
codegen_flags: <defaults>
</compile_context>

<pallas_src>
import functools

import jax
import jax.numpy as jnp
from jax import lax
from jax.experimental import pallas as pl
from jax.experimental.pallas import tpu as pltpu


@functools.lru_cache(maxsize=None)
def _tpu_hw():
    """Best-effort (physical VMEM bytes per TensorCore, TensorCores per chip)."""
    vmem = 128 << 20
    cores = 1
    try:
        info = pltpu.get_tpu_info()
        vmem = int(getattr(info, "vmem_capacity_bytes", vmem)) or vmem
        cores = 0
        for attr in ("num_cores", "tensorcore_count", "num_tensorcores",
                     "cores_per_chip", "core_count"):
            val = getattr(info, attr, None)
            if val:
                cores = int(val)
                break
        if not cores:
            # v7x exposes 64 MiB per TensorCore and has 2 TCs; v5e/v6e have
            # 128 MiB and a single TC.
            cores = 2 if vmem <= (96 << 20) else 1
    except Exception:
        vmem, cores = 128 << 20, 1
    return max(vmem, 32 << 20), max(cores, 1)


def _budgets():
    """Generation-aware budgets derived from physical VMEM."""
    vmem_phys, cores = _tpu_hw()
    big_budget = vmem_phys * 3 // 8     # ~24 MiB on v7x, ~48 MiB on v5e/v6e
    vmem_cap = vmem_phys * 4 // 5       # scoped-VMEM cap ~0.8x physical (headroom)
    return int(big_budget), int(vmem_cap), cores


def _vmem_limit_bytes(block_bytes, cap):
    # Requested blocks + headroom for weights / semaphores / compiler scratch;
    # never request the full physical VMEM.
    return int(min(max(block_bytes + (8 << 20), 24 << 20), cap))


def _pick_hw_tile(hw, c, itemsize, budget):
    """Lane-dense HW tile for the two-pass path (2x-in + 2x-out buffers)."""
    if hw < 128:
        # Tiny spatial extent: a full-extent lane block is the only legal
        # layout; such maps normally take the fused path anyway.
        return hw
    max_t = max(128, (budget // (4 * c * itemsize)) // 128 * 128)
    aligned = pl.cdiv(hw, 128) * 128
    t = min(aligned, max_t)
    if hw % 128 == 0:
        # Prefer an exact divisor (no masked tail) if one exists not far below t.
        d = t
        while d >= max(128, t // 2) and hw % d != 0:
            d -= 128
        if d >= 128 and hw % d == 0:
            t = d
    return t


def _weight_specs():
    # Grid-invariant parameters: whole-array, VMEM-resident, never re-fetched.
    return [pl.BlockSpec(memory_space=pltpu.MemorySpace.VMEM) for _ in range(4)]


def _cam_fused_kernel(x_ref, w1_ref, b1_ref, w2_ref, b2_ref, o_ref, *, inv_hw):
    """Fused pool -> excitation MLP -> scale for a (Bb, C, HW) block."""
    bb, c, hw = x_ref.shape
    ones = jnp.ones((hw, 1), dtype=x_ref.dtype)       # hoisted across the unroll
    for b in range(bb):                                # static unroll, bb kept small
        xb = x_ref[b]                                                   # (C, HW)
        # Squeeze: row-sum on the MXU (keeps the VPU/XLU free; exact f32 acc).
        pooled = jnp.dot(xb, ones, preferred_element_type=jnp.float32)  # (C, 1)
        avg = pooled * inv_hw                                           # true H*W mean
        # Excitation MLP in column orientation: scale comes out as (C, 1).
        h = jnp.dot(w1_ref[...], avg, preferred_element_type=jnp.float32) + b1_ref[...]
        h = jnp.maximum(h, 0.0)
        s = jax.nn.sigmoid(
            jnp.dot(w2_ref[...], h, preferred_element_type=jnp.float32) + b2_ref[...])
        # Scale: (C, 1) broadcasts over lanes, no relayout; multiply in f32.
        o_ref[b] = (xb * s).astype(o_ref.dtype)


def _cam_pool_kernel(x_ref, p_ref, *, hw, tile, tiles_per, needs_mask):
    """Pass A: accumulate the spatial sum of one (1, C, T) tile on the MXU."""
    t = pl.program_id(2)

    @pl.when(t == 0)
    def _init():
        p_ref[...] = jnp.zeros_like(p_ref)

    xb = x_ref[0]                                                       # (C, T)
    if needs_mask:
        # Ragged tail tile (HW % T != 0): zero the lanes past the true extent.
        start = (pl.program_id(0) * tiles_per + t) * tile
        lane = lax.broadcasted_iota(jnp.int32, xb.shape, 1)
        xb = jnp.where(lane + start < hw, xb, jnp.zeros_like(xb))
    ones = jnp.ones((tile, 1), dtype=xb.dtype)
    p_ref[...] += jnp.dot(xb, ones,
                          preferred_element_type=jnp.float32).reshape(p_ref.shape)


def _cam_scale_kernel(x_ref, s_ref, o_ref):
    """Pass B: lane-dense elementwise scale, out = x * s over one HW tile."""
    o_ref[...] = (x_ref[...] * s_ref[...]).astype(o_ref.dtype)


def channel_attention_module(x, w1, b1, w2, b2, *,
                             donate_input=False,
                             force_two_pass=False,
                             hw_tile=None,
                             force_core_split=None):
    """x: (B, C, H, W). w1: (Cr, C), b1: (Cr,), w2: (C, Cr), b2: (C,)."""
    B, C, H, W = x.shape
    Cr = w1.shape[0]
    HW = H * W
    isz = jnp.dtype(x.dtype).itemsize

    big_budget, vmem_cap, cores = _budgets()

    x_flat = x.reshape(B, C, HW)
    x_bytes = B * C * HW * isz
    w_bytes = int(sum(a.size * jnp.dtype(a.dtype).itemsize for a in (w1, b1, w2, b2)))
    alias = {0: 0} if donate_input else {}

    # Column-orientation parameters for the fused kernel (w1/w2 un-transposed).
    b1_col = b1.reshape(Cr, 1)
    b2_col = b2.reshape(C, 1)

    elem_bytes = C * HW * isz                     # one (C, HW) feature map
    use_fused = (not force_two_pass
                 and 4 * elem_bytes <= big_budget          # 2x-buffered in + out
                 and (cores == 1 or B >= cores))           # keep every TC busy (v7x)

    if use_fused:
        # Aggregate batch elements per grid step so small feature maps still get
        # large DMA blocks, while keeping >= `cores` grid steps and a bounded
        # in-kernel unroll.
        bb_cap = min(big_budget // (4 * elem_bytes), 16, max(1, B // cores))
        bb = max(d for d in range(1, int(bb_cap) + 1) if B % d == 0)
        block_bytes = 4 * bb * elem_bytes + w_bytes
        flops = int(B * (2 * C * HW + 4 * C * Cr + C * HW))
        out_flat = pl.pallas_call(
            functools.partial(_cam_fused_kernel, inv_hw=1.0 / HW),
            out_shape=jax.ShapeDtypeStruct((B, C, HW), x.dtype),
            grid_spec=pltpu.PrefetchScalarGridSpec(
                num_scalar_prefetch=0,
                grid=(B // bb,),
                in_specs=[pl.BlockSpec((bb, C, HW), lambda i: (i, 0, 0))]
                         + _weight_specs(),
                out_specs=pl.BlockSpec((bb, C, HW), lambda i: (i, 0, 0)),
            ),
            compiler_params=pltpu.CompilerParams(
                dimension_semantics=("parallel",),
                vmem_limit_bytes=_vmem_limit_bytes(block_bytes, vmem_cap),
            ),
            cost_estimate=pl.CostEstimate(
                flops=flops, transcendentals=int(B * C),
                bytes_accessed=int(2 * x_bytes + w_bytes)),
            input_output_aliases=alias,
        )(x_flat, w1, b1_col, w2, b2_col)
        return out_flat.reshape(B, C, H, W)

    # ---------------- two-pass fallback ----------------
    if hw_tile is not None:
        assert hw_tile == HW or (hw_tile % 128 == 0
                                 and hw_tile <= pl.cdiv(HW, 128) * 128), \
            "hw_tile must be a multiple of 128 (<= padded HW) or the full H*W"
        T = hw_tile
    else:
        T = _pick_hw_tile(HW, C, isz, big_budget)
    n_t = pl.cdiv(HW, T)
    needs_mask = (HW % T) != 0

    # Split the HW reduction across TensorCores when batch alone cannot fill
    # them (v7x small-batch); partials are combined in XLA below.
    want_split = int(force_core_split) if force_core_split is not None else (
        cores if (cores > 1 and B < cores) else 1)
    n_split = want_split if (want_split > 1 and n_t % want_split == 0) else 1
    tiles_per = n_t // n_split

    # Pass A: pooled sums only (excitation MLP hoisted to XLA).
    partials = pl.pallas_call(
        functools.partial(_cam_pool_kernel, hw=HW, tile=T,
                          tiles_per=tiles_per, needs_mask=needs_mask),
        out_shape=jax.ShapeDtypeStruct((n_split, B, C, 1), jnp.float32),
        grid_spec=pltpu.PrefetchScalarGridSpec(
            num_scalar_prefetch=0,
            grid=(n_split, B, tiles_per),                   # reduction axis last
            in_specs=[pl.BlockSpec((1, C, T),
                                   lambda s, b, t: (b, 0, s * tiles_per + t))],
            out_specs=pl.BlockSpec((1, 1, C, 1), lambda s, b, t: (s, b, 0, 0)),
        ),
        compiler_params=pltpu.CompilerParams(
            dimension_semantics=("parallel", "parallel", "arbitrary"),
            vmem_limit_bytes=_vmem_limit_bytes(2 * C * T * isz, vmem_cap),
        ),
        cost_estimate=pl.CostEstimate(
            flops=int(2 * B * C * HW), transcendentals=0,
            bytes_accessed=int(x_bytes + n_split * B * C * 4)),
    )(x_flat)

    # Excitation MLP in XLA: batches the tiny M=1 matmuls and keeps the
    # weights out of pass A's VMEM budget (frees room for a larger T).
    pooled = partials.sum(axis=0)[..., 0]                   # (B, C) f32
    avg = pooled * (1.0 / HW)
    h = jnp.maximum(avg @ w1.T.astype(jnp.float32) + b1.astype(jnp.float32), 0.0)
    s = jax.nn.sigmoid(h @ w2.T.astype(jnp.float32) + b2.astype(jnp.float32))
    s_col = s.reshape(B, C, 1)                              # (C, 1) per batch elem

    # Pass B: lane-dense scale; ragged tail handled by clipped partial writes.
    out_flat = pl.pallas_call(
        _cam_scale_kernel,
        out_shape=jax.ShapeDtypeStruct((B, C, HW), x.dtype),
        grid_spec=pltpu.PrefetchScalarGridSpec(
            num_scalar_prefetch=0,
            grid=(B, n_t),
            in_specs=[
                pl.BlockSpec((1, C, T), lambda b, t: (b, 0, t)),
                pl.BlockSpec((1, C, 1), lambda b, t: (b, 0, 0)),
            ],
            out_specs=pl.BlockSpec((1, C, T), lambda b, t: (b, 0, t)),
        ),
        compiler_params=pltpu.CompilerParams(
            dimension_semantics=("parallel", "parallel"),   # megacore over B and HW
            vmem_limit_bytes=_vmem_limit_bytes(4 * C * T * isz, vmem_cap),
        ),
        cost_estimate=pl.CostEstimate(
            flops=int(B * C * HW), transcendentals=0,
            bytes_accessed=int(2 * x_bytes + B * C * 4)),
        input_output_aliases=alias,
    )(x_flat, s_col)
    return out_flat.reshape(B, C, H, W)


def _reference(x, w1, b1, w2, b2):
    # Pure-JAX reference matching the PyTorch module exactly.
    avg = jnp.mean(x, axis=(2, 3))                       # (B, C)
    h = jnp.maximum(avg @ w1.T + b1, 0.0)                # (B, Cr)
    s = jax.nn.sigmoid(h @ w2.T + b2)                    # (B, C)
    return x * s[:, :, None, None]


if __name__ == "__main__":
    B, C, H, W = 2, 4, 16, 16
    reduction_ratio = 2
    Cr = C // reduction_ratio

    key = jax.random.PRNGKey(0)
    kx, k1, k2, k3, k4, kx2 = jax.random.split(key, 6)

    x = jax.random.normal(kx, (B, C, H, W), dtype=jnp.float32)
    # Deterministic synthetic parameters for the two 1x1 convs (bias=True).
    w1 = jax.random.normal(k1, (Cr, C), dtype=jnp.float32) * 0.5   # Conv2d(C -> C/r, k=1)
    b1 = jax.random.normal(k2, (Cr,), dtype=jnp.float32) * 0.1
    w2 = jax.random.normal(k3, (C, Cr), dtype=jnp.float32) * 0.5   # Conv2d(C/r -> C, k=1)
    b2 = jax.random.normal(k4, (C,), dtype=jnp.float32) * 0.1

    ref = _reference(x, w1, b1, w2, b2)

    # 1) Default path (fused single pass at these sizes).
    out = jax.block_until_ready(channel_attention_module(x, w1, b1, w2, b2))
    assert out.shape == (B, C, H, W)
    assert jnp.allclose(out, ref, atol=1e-5, rtol=1e-5), "fused path mismatch"

    # 2) Two-pass path: MXU pool kernel + XLA excitation MLP + scale kernel.
    out_tp = jax.block_until_ready(channel_attention_module(
        x, w1, b1, w2, b2, force_two_pass=True, hw_tile=128))
    assert jnp.allclose(out_tp, ref, atol=1e-5, rtol=1e-5), "two-pass path mismatch"

    # 3) Ragged spatial extent (H*W = 144, not a multiple of 128): exercises the
    #    masked tail tile in pass A / clipped writes in pass B, plus the
    #    cross-TensorCore reduction split used for small batches on v7x.
    x2 = jax.random.normal(kx2, (B, C, 12, 12), dtype=jnp.float32)
    ref2 = _reference(x2, w1, b1, w2, b2)
    out2 = jax.block_until_ready(channel_attention_module(x2, w1, b1, w2, b2))
    assert jnp.allclose(out2, ref2, atol=1e-5, rtol=1e-5), "fused ragged-HW mismatch"
    out2_tp = jax.block_until_ready(channel_attention_module(
        x2, w1, b1, w2, b2, force_two_pass=True, hw_tile=128, force_core_split=2))
    assert jnp.allclose(out2_tp, ref2, atol=1e-5, rtol=1e-5), "two-pass ragged mismatch"

    print("KERNEL_OK")
</pallas_src>

<mosaic_0001>
module attributes {stable_mosaic.version = 11 : i64} {
  func.func @_cam_fused_kernel(%arg0: i32, %arg1: memref<2x4x256xf32, #tpu.memory_space<vmem>>, %arg2: memref<2x4xf32, #tpu.memory_space<vmem>>, %arg3: memref<2x1xf32, #tpu.memory_space<vmem>>, %arg4: memref<4x2xf32, #tpu.memory_space<vmem>>, %arg5: memref<4x1xf32, #tpu.memory_space<vmem>>, %arg6: memref<2x4x256xf32, #tpu.memory_space<vmem>>) attributes {dimension_semantics = [#tpu.dimension_semantics<parallel>], iteration_bounds = array<i64: 1>, scalar_prefetch = 0 : i64, scratch_operands = 0 : i64, tpu.core_type = #tpu.core_type<tc>, window_params = [{transform_indices = @transform_0, window_bounds = array<i64: 2, 4, 256>}, {pipeline_mode = #tpu.pipeline_mode<synchronous>, transform_indices = @transform_1, window_bounds = array<i64: 2, 4>}, {pipeline_mode = #tpu.pipeline_mode<synchronous>, transform_indices = @transform_2, window_bounds = array<i64: 2, 1>}, {pipeline_mode = #tpu.pipeline_mode<synchronous>, transform_indices = @transform_3, window_bounds = array<i64: 4, 2>}, {pipeline_mode = #tpu.pipeline_mode<synchronous>, transform_indices = @transform_4, window_bounds = array<i64: 4, 1>}, {transform_indices = @transform_5, window_bounds = array<i64: 2, 4, 256>}]} {
    %cst = arith.constant 1.000000e+00 : f32
    %0 = vector.broadcast %cst : f32 to vector<256x1xf32>
    %c0 = arith.constant 0 : index
    %c0_0 = arith.constant 0 : index
    %c0_1 = arith.constant 0 : index
    %1 = vector.load %arg1[%c0, %c0_0, %c0_1] : memref<2x4x256xf32, #tpu.memory_space<vmem>>, vector<1x4x256xf32>
    %2 = vector.shape_cast %1 : vector<1x4x256xf32> to vector<4x256xf32>
    %cst_2 = arith.constant dense<0.000000e+00> : vector<4x1xf32>
    %3 = tpu.matmul %2, %0, %cst_2 {dimension_numbers = #tpu.dot_dimension_numbers<[1], [0], [0], [1], [0, 0, 1, 1], [], []>} : vector<4x256xf32>, vector<256x1xf32>, vector<4x1xf32> -> vector<4x1xf32>
    %cst_3 = arith.constant 3.906250e-03 : f32
    %4 = vector.broadcast %cst_3 : f32 to vector<4x1xf32>
    %5 = arith.mulf %3, %4 : vector<4x1xf32>
    %c0_4 = arith.constant 0 : index
    %c0_5 = arith.constant 0 : index
    %6 = vector.load %arg2[%c0_4, %c0_5] : memref<2x4xf32, #tpu.memory_space<vmem>>, vector<2x4xf32>
    %cst_6 = arith.constant dense<0.000000e+00> : vector<2x1xf32>
    %7 = tpu.matmul %6, %5, %cst_6 {dimension_numbers = #tpu.dot_dimension_numbers<[1], [0], [0], [1], [0, 0, 1, 1], [], []>} : vector<2x4xf32>, vector<4x1xf32>, vector<2x1xf32> -> vector<2x1xf32>
    %c0_7 = arith.constant 0 : index
    %c0_8 = arith.constant 0 : index
    %8 = vector.load %arg3[%c0_7, %c0_8] : memref<2x1xf32, #tpu.memory_space<vmem>>, vector<2x1xf32>
    %9 = arith.addf %7, %8 : vector<2x1xf32>
    %cst_9 = arith.constant 0.000000e+00 : f32
    %10 = vector.broadcast %cst_9 : f32 to vector<2x1xf32>
    %11 = arith.maximumf %9, %10 : vector<2x1xf32>
    %c0_10 = arith.constant 0 : index
    %c0_11 = arith.constant 0 : index
    %12 = vector.load %arg4[%c0_10, %c0_11] : memref<4x2xf32, #tpu.memory_space<vmem>>, vector<4x2xf32>
    %cst_12 = arith.constant dense<0.000000e+00> : vector<4x1xf32>
    %13 = tpu.matmul %12, %11, %cst_12 {dimension_numbers = #tpu.dot_dimension_numbers<[1], [0], [0], [1], [0, 0, 1, 1], [], []>} : vector<4x2xf32>, vector<2x1xf32>, vector<4x1xf32> -> vector<4x1xf32>
    %c0_13 = arith.constant 0 : index
    %c0_14 = arith.constant 0 : index
    %14 = vector.load %arg5[%c0_13, %c0_14] : memref<4x1xf32, #tpu.memory_space<vmem>>, vector<4x1xf32>
    %15 = arith.addf %13, %14 : vector<4x1xf32>
    %16 = arith.negf %15 : vector<4x1xf32>
    %17 = math.exp %16 : vector<4x1xf32>
    %cst_15 = arith.constant 1.000000e+00 : f32
    %18 = vector.broadcast %cst_15 : f32 to vector<4x1xf32>
    %19 = arith.addf %18, %17 : vector<4x1xf32>
    %20 = arith.divf %18, %19 : vector<4x1xf32>
    %21 = vector.broadcast %20 : vector<4x1xf32> to vector<4x256xf32>
    %22 = arith.mulf %2, %21 : vector<4x256xf32>
    %c0_16 = arith.constant 0 : index
    %c0_17 = arith.constant 0 : index
    %c0_18 = arith.constant 0 : index
    %23 = vector.load %arg6[%c0_16, %c0_17, %c0_18] : memref<2x4x256xf32, #tpu.memory_space<vmem>>, vector<1x4x256xf32>
    %24 = vector.shape_cast %23 : vector<1x4x256xf32> to vector<4x256xf32>
    %25 = vector.shape_cast %22 : vector<4x256xf32> to vector<1x4x256xf32>
    tpu.vector_store %arg6[%c0_16, %c0_17, %c0_18], %25 {strides = array<i32>} : memref<2x4x256xf32, #tpu.memory_space<vmem>>, vector<1x4x256xf32>,
    %c1 = arith.constant 1 : index
    %c0_19 = arith.constant 0 : index
    %c0_20 = arith.constant 0 : index
    %26 = vector.load %arg1[%c1, %c0_19, %c0_20] : memref<2x4x256xf32, #tpu.memory_space<vmem>>, vector<1x4x256xf32>
    %27 = vector.shape_cast %26 : vector<1x4x256xf32> to vector<4x256xf32>
    %cst_21 = arith.constant dense<0.000000e+00> : vector<4x1xf32>
    %28 = tpu.matmul %27, %0, %cst_21 {dimension_numbers = #tpu.dot_dimension_numbers<[1], [0], [0], [1], [0, 0, 1, 1], [], []>} : vector<4x256xf32>, vector<256x1xf32>, vector<4x1xf32> -> vector<4x1xf32>
    %cst_22 = arith.constant 3.906250e-03 : f32
    %29 = vector.broadcast %cst_22 : f32 to vector<4x1xf32>
    %30 = arith.mulf %28, %29 : vector<4x1xf32>
    %c0_23 = arith.constant 0 : index
    %c0_24 = arith.constant 0 : index
    %31 = vector.load %arg2[%c0_23, %c0_24] : memref<2x4xf32, #tpu.memory_space<vmem>>, vector<2x4xf32>
    %cst_25 = arith.constant dense<0.000000e+00> : vector<2x1xf32>
    %32 = tpu.matmul %31, %30, %cst_25 {dimension_numbers = #tpu.dot_dimension_numbers<[1], [0], [0], [1], [0, 0, 1, 1], [], []>} : vector<2x4xf32>, vector<4x1xf32>, vector<2x1xf32> -> vector<2x1xf32>
    %c0_26 = arith.constant 0 : index
    %c0_27 = arith.constant 0 : index
    %33 = vector.load %arg3[%c0_26, %c0_27] : memref<2x1xf32, #tpu.memory_space<vmem>>, vector<2x1xf32>
    %34 = arith.addf %32, %33 : vector<2x1xf32>
    %cst_28 = arith.constant 0.000000e+00 : f32
    %35 = vector.broadcast %cst_28 : f32 to vector<2x1xf32>
    %36 = arith.maximumf %34, %35 : vector<2x1xf32>
    %c0_29 = arith.constant 0 : index
    %c0_30 = arith.constant 0 : index
    %37 = vector.load %arg4[%c0_29, %c0_30] : memref<4x2xf32, #tpu.memory_space<vmem>>, vector<4x2xf32>
    %cst_31 = arith.constant dense<0.000000e+00> : vector<4x1xf32>
    %38 = tpu.matmul %37, %36, %cst_31 {dimension_numbers = #tpu.dot_dimension_numbers<[1], [0], [0], [1], [0, 0, 1, 1], [], []>} : vector<4x2xf32>, vector<2x1xf32>, vector<4x1xf32> -> vector<4x1xf32>
    %c0_32 = arith.constant 0 : index
    %c0_33 = arith.constant 0 : index
    %39 = vector.load %arg5[%c0_32, %c0_33] : memref<4x1xf32, #tpu.memory_space<vmem>>, vector<4x1xf32>
    %40 = arith.addf %38, %39 : vector<4x1xf32>
    %41 = arith.negf %40 : vector<4x1xf32>
    %42 = math.exp %41 : vector<4x1xf32>
    %cst_34 = arith.constant 1.000000e+00 : f32
    %43 = vector.broadcast %cst_34 : f32 to vector<4x1xf32>
    %44 = arith.addf %43, %42 : vector<4x1xf32>
    %45 = arith.divf %43, %44 : vector<4x1xf32>
    %46 = vector.broadcast %45 : vector<4x1xf32> to vector<4x256xf32>
    %47 = arith.mulf %27, %46 : vector<4x256xf32>
    %c1_35 = arith.constant 1 : index
    %c0_36 = arith.constant 0 : index
    %c0_37 = arith.constant 0 : index
    %48 = vector.load %arg6[%c1_35, %c0_36, %c0_37] : memref<2x4x256xf32, #tpu.memory_space<vmem>>, vector<1x4x256xf32>
    %49 = vector.shape_cast %48 : vector<1x4x256xf32> to vector<4x256xf32>
    %50 = vector.shape_cast %47 : vector<4x256xf32> to vector<1x4x256xf32>
    tpu.vector_store %arg6[%c1_35, %c0_36, %c0_37], %50 {strides = array<i32>} : memref<2x4x256xf32, #tpu.memory_space<vmem>>, vector<1x4x256xf32>,
    return
  }
  func.func @transform_0(%arg0: i32) -> (i32, i32, i32) {
    %c0_i32 = arith.constant 0 : i32
    %c0_i32_0 = arith.constant 0 : i32
    %c0_i32_1 = arith.constant 0 : i32
    return %arg0, %c0_i32, %c0_i32_0 : i32, i32, i32
  }
  func.func @transform_1(%arg0: i32) -> (i32, i32) {
    %c0_i32 = arith.constant 0 : i32
    %c0_i32_0 = arith.constant 0 : i32
    %c0_i32_1 = arith.constant 0 : i32
    return %c0_i32, %c0_i32_0 : i32, i32
  }
  func.func @transform_2(%arg0: i32) -> (i32, i32) {
    %c0_i32 = arith.constant 0 : i32
    %c0_i32_0 = arith.constant 0 : i32
    %c0_i32_1 = arith.constant 0 : i32
    return %c0_i32, %c0_i32_0 : i32, i32
  }
  func.func @transform_3(%arg0: i32) -> (i32, i32) {
    %c0_i32 = arith.constant 0 : i32
    %c0_i32_0 = arith.constant 0 : i32
    %c0_i32_1 = arith.constant 0 : i32
    return %c0_i32, %c0_i32_0 : i32, i32
  }
  func.func @transform_4(%arg0: i32) -> (i32, i32) {
    %c0_i32 = arith.constant 0 : i32
    %c0_i32_0 = arith.constant 0 : i32
    %c0_i32_1 = arith.constant 0 : i32
    return %c0_i32, %c0_i32_0 : i32, i32
  }
  func.func @transform_5(%arg0: i32) -> (i32, i32, i32) {
    %c0_i32 = arith.constant 0 : i32
    %c0_i32_0 = arith.constant 0 : i32
    %c0_i32_1 = arith.constant 0 : i32
    return %arg0, %c0_i32, %c0_i32_0 : i32, i32, i32
  }
}

</mosaic_0001>

<llo_original>
// kernel: tpu_custom_call.1
$region0: #{tpu_custom_call.1}
  #allocation0 [shape = 'u32[]', space=smem, size = 0x4, offset = 0x4, fixed_abs, tag = 'smem constant byte address 0x4 - core index']
  #allocation1 [shape = 'u32[144,128]{1,0:T(1,128)}', space=vmem, size = 0x12000, scoped, tag = 'internal scratch']
  %s0 = inlined_call_operand.hbm [shape: f32[2,4,256], index: 0, kind: input, shape index: {}]
  %s1 = inlined_call_operand.vmem [shape: f32[2,4], index: 1, kind: input, shape index: {}]
  %s2 = inlined_call_operand.vmem [shape: f32[2,1], index: 2, kind: input, shape index: {}]
  %s3 = inlined_call_operand.vmem [shape: f32[4,2], index: 3, kind: input, shape index: {}]
  %s4 = inlined_call_operand.vmem [shape: f32[4,1], index: 4, kind: input, shape index: {}]
  %s5 = inlined_call_operand.hbm [shape: f32[2,4,256], index: 5, kind: output, shape index: {}]
  %s6 = sld [smem:[#allocation0]]
  $region34: #{tpu_custom_call.1} parent=0
    _
  %s8 = ssub.s32 1, %s6
  %s9 = scalar_select 0, %s8, %s6
  $region1: #{tpu_custom_call.1} parent=0
    #allocation2 [shape = 'u8[8192]{0}', space=vmem, size = 0x2000, scoped, tag = 'input window, operand 0, single buffered']
    #allocation3 [shape = 's32[1]{0}', space=sflag, size = 0x4, scoped, tag = 'scoped memory for tpu_custom_call.1']
    #allocation4 [shape = 's32[1]{0}', space=sflag, size = 0x4, scoped, tag = 'scoped memory for tpu_custom_call.1']
    #allocation5 [shape = 'u8[8192]{0}', space=vmem, size = 0x2000, scoped, tag = 'output window, operand 0, single buffered']
    %10 = vsyncpa [#allocation3], 0
    %11 = vsyncpa [#allocation4], 0
    // Predicated region
    $region2: #{tpu_custom_call.1} parent=1 // pred_check
      _
    $region3: #{tpu_custom_call.1} parent=1 // pred_check_branch
      %13 = sbr.rel (0) target = $region5
    $region4: #{tpu_custom_call.1} parent=1 // pred_region
      %s15 = ssub.s32 256, 256
      %16 = vsyncadd [#allocation3], %s15
      %s17 = sshll.u32 [#allocation2], 4
      %s18 = int_to_ptr.vmem [resolvable:$true] %s17
      %23 = dma.hbm_to_vmem [thread:$0]  %s0, 256, %s18, [#allocation3], 128, 128, 8
    $region5: #{tpu_custom_call.1} parent=1 // pred_fallthru
      _
    // Predicated region
    $region6: #{tpu_custom_call.1} parent=1 // pred_check
      _
    $region7: #{tpu_custom_call.1} parent=1 // pred_check_branch
      %25 = sbr.rel (0) target = $region9
    $region8: #{tpu_custom_call.1} parent=1 // pred_region
      _
    $region9: #{tpu_custom_call.1} parent=1 // pred_fallthru
      _
    // Predicated region
    $region10: #{tpu_custom_call.1} parent=1 // pred_check
      _
    $region11: #{tpu_custom_call.1} parent=1 // pred_check_branch
      %27 = sbr.rel (0) target = $region13
    $region12: #{tpu_custom_call.1} parent=1 // pred_region
      _
    $region13: #{tpu_custom_call.1} parent=1 // pred_fallthru
      _
    // Predicated region
    $region14: #{tpu_custom_call.1} parent=1 // pred_check
      _
    $region15: #{tpu_custom_call.1} parent=1 // pred_check_branch
      %29 = sbr.rel (0) target = $region17
    $region16: #{tpu_custom_call.1} parent=1 // pred_region
      _
    $region17: #{tpu_custom_call.1} parent=1 // pred_fallthru
      _
    // Predicated region
    $region18: #{tpu_custom_call.1} parent=1 // pred_check
      _
    $region19: #{tpu_custom_call.1} parent=1 // pred_check_branch
      %31 = sbr.rel (0) target = $region21
    $region20: #{tpu_custom_call.1} parent=1 // pred_region
      _
    $region21: #{tpu_custom_call.1} parent=1 // pred_fallthru
      _
    // Predicated region
    $region22: #{tpu_custom_call.1} parent=1 // pred_check
      _
    $region23: #{tpu_custom_call.1} parent=1 // pred_check_branch
      %33 = sbr.rel (0) target = $region25
    $region24: #{tpu_custom_call.1} parent=1 // pred_region
      %34 = dma.done [#allocation3], 256
    $region25: #{tpu_custom_call.1} parent=1 // pred_fallthru
      _
    %v35 = vld [vmem:[#allocation2] sm:$0xff]
    %v37 = vcombine.high %v35, %v35
    %39 = vmatprep.subr.mxu0 0.0
    %40 = vmatpush1.msra.mxu0 1.0
    %41 = vmatprep.subr.mxu0 0.0
    %42 = vmatpush1.msra.mxu0 1.0
    %43 = vmatprep.subr.mxu0 0.0
    %44 = vmatpush1.msra.mxu0 1.0
    %45 = vmatprep.subr.mxu0 0.0
    %46 = vmatpush1.msra.mxu0 1.0
    %47 = vmatprep.subr.mxu0 0.0
    %48 = vmatpush1.msra.mxu0 1.0
    %49 = vmatprep.subr.mxu0 0.0
    %50 = vmatpush1.msra.mxu0 1.0
    %51 = vmatprep.subr.mxu0 0.0
    %52 = vmatpush1.msra.mxu0 1.0
    %53 = vmatprep.subr.mxu0 0.0
    %54 = vmatpush1.msra.mxu0 1.0
    %55 = vmatprep.subr.mxu0 0.0
    %56 = vmatpush1.msra.mxu0 1.0
    %57 = vmatprep.subr.mxu0 0.0
    %58 = vmatpush1.msra.mxu0 1.0
    %59 = vmatprep.subr.mxu0 0.0
    %60 = vmatpush1.msra.mxu0 1.0
    %61 = vmatprep.subr.mxu0 0.0
    %62 = vmatpush1.msra.mxu0 1.0
    %63 = vmatprep.subr.mxu0 0.0
    %64 = vmatpush1.msra.mxu0 1.0
    %65 = vmatprep.subr.mxu0 0.0
    %66 = vmatpush1.msra.mxu0 1.0
    %67 = vmatprep.subr.mxu0 0.0
    %68 = vmatpush1.msra.mxu0 1.0
    %69 = vmatprep.subr.mxu0 0.0
    %70 = vmatpush1.msra.mxu0 1.0
    %71 = vmatprep.subr.mxu0 0.0
    %72 = vmatpush1.msra.mxu0 1.0
    %73 = vmatprep.subr.mxu0 0.0
    %74 = vmatpush1.msra.mxu0 1.0
    %75 = vmatprep.subr.mxu0 0.0
    %76 = vmatpush1.msra.mxu0 1.0
    %77 = vmatprep.subr.mxu0 0.0
    %78 = vmatpush1.msra.mxu0 1.0
    %79 = vmatprep.subr.mxu0 0.0
    %80 = vmatpush1.msra.mxu0 1.0
    %81 = vmatprep.subr.mxu0 0.0
    %82 = vmatpush1.msra.mxu0 1.0
    %83 = vmatprep.subr.mxu0 0.0
    %84 = vmatpush1.msra.mxu0 1.0
    %85 = vmatprep.subr.mxu0 0.0
    %86 = vmatpush1.msra.mxu0 1.0
    %87 = vmatprep.subr.mxu0 0.0
    %88 = vmatpush1.msra.mxu0 1.0
    %89 = vmatprep.subr.mxu0 0.0
    %90 = vmatpush1.msra.mxu0 1.0
    %91 = vmatprep.subr.mxu0 0.0
    %92 = vmatpush1.msra.mxu0 1.0
    %93 = vmatprep.subr.mxu0 0.0
    %94 = vmatpush1.msra.mxu0 1.0
    %95 = vmatprep.subr.mxu0 0.0
    %96 = vmatpush1.msra.mxu0 1.0
    %97 = vmatprep.subr.mxu0 0.0
    %98 = vmatpush1.msra.mxu0 1.0
    %99 = vmatprep.subr.mxu0 0.0
    %100 = vmatpush1.msra.mxu0 1.0
    %101 = vmatprep.subr.mxu0 0.0
    %102 = vmatpush1.msra.mxu0 1.0
    %103 = vmatprep.mubr.f32.mxu0 %v37
    %104 = vmatmul.mubr.f32.gmra.mrb[0].mxu0 %v35
    %v105 = vpop.f32.mrb[0].mxu0
    %v106 = vadd.f32 0.0, %v105
    %v107 = vpop.f32.mrb[0].mxu0
    %108 = vdwg.mxu0
    %v109 = vmul.f32 %v106, 0.00390625
    %v110 = vld [vmem:[%s1] sm:$0x3]
    %v111 = vld [vmem:[%s2] sm:$0x3]
    %vm112 = vcmask 31744
    %v114 = vsel %vm112, %v110, 0
    %vm116 = vcmask 1043456
    %v118 = vsel %vm116, %v109, 0
    %120 = vmatprep.subr.mxu0 0.0
    %121 = vmatpush1.msra.mxu0 %v118
    %122 = vmatprep.subr.mxu0 0.0
    %123 = vmatpush1.msra.mxu0 0.0
    %124 = vmatprep.subr.mxu0 0.0
    %125 = vmatpush1.msra.mxu0 0.0
    %126 = vmatprep.subr.mxu0 0.0
    %127 = vmatpush1.msra.mxu0 0.0
    %128 = vmatprep.subr.mxu0 0.0
    %129 = vmatpush1.msra.mxu0 0.0
    %130 = vmatprep.subr.mxu0 0.0
    %131 = vmatpush1.msra.mxu0 0.0
    %132 = vmatprep.subr.mxu0 0.0
    %133 = vmatpush1.msra.mxu0 0.0
    %134 = vmatprep.subr.mxu0 0.0
    %135 = vmatpush1.msra.mxu0 0.0
    %136 = vmatprep.subr.mxu0 0.0
    %137 = vmatpush1.msra.mxu0 0.0
    %138 = vmatprep.subr.mxu0 0.0
    %139 = vmatpush1.msra.mxu0 0.0
    %140 = vmatprep.subr.mxu0 0.0
    %141 = vmatpush1.msra.mxu0 0.0
    %142 = vmatprep.subr.mxu0 0.0
    %143 = vmatpush1.msra.mxu0 0.0
    %144 = vmatprep.subr.mxu0 0.0
    %145 = vmatpush1.msra.mxu0 0.0
    %146 = vmatprep.subr.mxu0 0.0
    %147 = vmatpush1.msra.mxu0 0.0
    %148 = vmatprep.subr.mxu0 0.0
    %149 = vmatpush1.msra.mxu0 0.0
    %150 = vmatprep.subr.mxu0 0.0
    %151 = vmatpush1.msra.mxu0 0.0
    %152 = vmatprep.subr.mxu0 0.0
    %153 = vmatpush1.msra.mxu0 0.0
    %154 = vmatprep.subr.mxu0 0.0
    %155 = vmatpush1.msra.mxu0 0.0
    %156 = vmatprep.subr.mxu0 0.0
    %157 = vmatpush1.msra.mxu0 0.0
    %158 = vmatprep.subr.mxu0 0.0
    %159 = vmatpush1.msra.mxu0 0.0
    %160 = vmatprep.subr.mxu0 0.0
    %161 = vmatpush1.msra.mxu0 0.0
    %162 = vmatprep.subr.mxu0 0.0
    %163 = vmatpush1.msra.mxu0 0.0
    %164 = vmatprep.subr.mxu0 0.0
    %165 = vmatpush1.msra.mxu0 0.0
    %166 = vmatprep.subr.mxu0 0.0
    %167 = vmatpush1.msra.mxu0 0.0
    %168 = vmatprep.subr.mxu0 0.0
    %169 = vmatpush1.msra.mxu0 0.0
    %170 = vmatprep.subr.mxu0 0.0
    %171 = vmatpush1.msra.mxu0 0.0
    %172 = vmatprep.subr.mxu0 0.0
    %173 = vmatpush1.msra.mxu0 0.0
    %174 = vmatprep.subr.mxu0 0.0
    %175 = vmatpush1.msra.mxu0 0.0
    %176 = vmatprep.subr.mxu0 0.0
    %177 = vmatpush1.msra.mxu0 0.0
    %178 = vmatprep.subr.mxu0 0.0
    %179 = vmatpush1.msra.mxu0 0.0
    %180 = vmatprep.subr.mxu0 0.0
    %181 = vmatpush1.msra.mxu0 0.0
    %182 = vmatprep.subr.mxu0 0.0
    %183 = vmatpush1.msra.mxu0 0.0
    %184 = vmatprep.mubr.f32.mxu0 0.0
    %185 = vmatmul.mubr.f32.gmra.mrb[0].mxu0 %v114
    %v186 = vpop.f32.mrb[0].mxu0
    %v187 = vadd.f32 %v111, %v186
    %v188 = vpop.f32.mrb[0].mxu0
    %189 = vdwg.mxu0
    %v190 = vmax.f32 %v187, 0.0
    %v191 = vld [vmem:[%s3] sm:$0xf]
    %v192 = vld [vmem:[%s4] sm:$0xf]
    %vm193 = vcmask 15360
    %v195 = vsel %vm193, %v191, 0
    %vm197 = vcmask 1041408
    %v199 = vsel %vm197, %v190, 0
    %201 = vmatprep.subr.mxu0 0.0
    %202 = vmatpush1.msra.mxu0 %v199
    %203 = vmatprep.subr.mxu0 0.0
    %204 = vmatpush1.msra.mxu0 0.0
    %205 = vmatprep.subr.mxu0 0.0
    %206 = vmatpush1.msra.mxu0 0.0
    %207 = vmatprep.subr.mxu0 0.0
    %208 = vmatpush1.msra.mxu0 0.0
    %209 = vmatprep.subr.mxu0 0.0
    %210 = vmatpush1.msra.mxu0 0.0
    %211 = vmatprep.subr.mxu0 0.0
    %212 = vmatpush1.msra.mxu0 0.0
    %213 = vmatprep.subr.mxu0 0.0
    %214 = vmatpush1.msra.mxu0 0.0
    %215 = vmatprep.subr.mxu0 0.0
    %216 = vmatpush1.msra.mxu0 0.0
    %217 = vmatprep.subr.mxu0 0.0
    %218 = vmatpush1.msra.mxu0 0.0
    %219 = vmatprep.subr.mxu0 0.0
    %220 = vmatpush1.msra.mxu0 0.0
    %221 = vmatprep.subr.mxu0 0.0
    %222 = vmatpush1.msra.mxu0 0.0
    %223 = vmatprep.subr.mxu0 0.0
    %224 = vmatpush1.msra.mxu0 0.0
    %225 = vmatprep.subr.mxu0 0.0
    %226 = vmatpush1.msra.mxu0 0.0
    %227 = vmatprep.subr.mxu0 0.0
    %228 = vmatpush1.msra.mxu0 0.0
    %229 = vmatprep.subr.mxu0 0.0
    %230 = vmatpush1.msra.mxu0 0.0
    %231 = vmatprep.subr.mxu0 0.0
    %232 = vmatpush1.msra.mxu0 0.0
    %233 = vmatprep.subr.mxu0 0.0
    %234 = vmatpush1.msra.mxu0 0.0
    %235 = vmatprep.subr.mxu0 0.0
    %236 = vmatpush1.msra.mxu0 0.0
    %237 = vmatprep.subr.mxu0 0.0
    %238 = vmatpush1.msra.mxu0 0.0
    %239 = vmatprep.subr.mxu0 0.0
    %240 = vmatpush1.msra.mxu0 0.0
    %241 = vmatprep.subr.mxu0 0.0
    %242 = vmatpush1.msra.mxu0 0.0
    %243 = vmatprep.subr.mxu0 0.0
    %244 = vmatpush1.msra.mxu0 0.0
    %245 = vmatprep.subr.mxu0 0.0
    %246 = vmatpush1.msra.mxu0 0.0
    %247 = vmatprep.subr.mxu0 0.0
    %248 = vmatpush1.msra.mxu0 0.0
    %249 = vmatprep.subr.mxu0 0.0
    %250 = vmatpush1.msra.mxu0 0.0
    %251 = vmatprep.subr.mxu0 0.0
    %252 = vmatpush1.msra.mxu0 0.0
    %253 = vmatprep.subr.mxu0 0.0
    %254 = vmatpush1.msra.mxu0 0.0
    %255 = vmatprep.subr.mxu0 0.0
    %256 = vmatpush1.msra.mxu0 0.0
    %257 = vmatprep.subr.mxu0 0.0
    %258 = vmatpush1.msra.mxu0 0.0
    %259 = vmatprep.subr.mxu0 0.0
    %260 = vmatpush1.msra.mxu0 0.0
    %261 = vmatprep.subr.mxu0 0.0
    %262 = vmatpush1.msra.mxu0 0.0
    %263 = vmatprep.subr.mxu0 0.0
    %264 = vmatpush1.msra.mxu0 0.0
    %265 = vmatprep.mubr.f32.mxu0 0.0
    %266 = vmatmul.mubr.f32.gmra.mrb[0].mxu0 %v195
    %v267 = vpop.f32.mrb[0].mxu0
    %v268 = vadd.f32 %v192, %v267
    %v269 = vpop.f32.mrb[0].mxu0
    %270 = vdwg.mxu0
    %v271 = vxor.u32 %v268, 2147483648
    %v272 = vmul.f32 %v271, 1.442695
    %v273 = vpow.pop %v272
    %v274 = vadd.f32 %v273, 1.0
    %v275 = vrcp.pop %v274
    %v276 = vmul.f32 1.0, %v275
    %278 = vset.pattern.permute.xlu0 0
    %279 = vperm.xlu0 %278, %v276
    %v280 = vpop.permute.xlu0 %279
    %v282 = vunpack.c.l.s4 839922192
    %v283 = vunpack.c.0.s8 %v282
    %v284 = vlaneseq
    %v285 = vshrl.u32 %v284, 7
    %v286 = vsub.s32 %v283, %v285
    %v287 = vrot.slane %v280, %v286
    %v289 = vmul.f32 %v35, %v287
    %290 = vst [vmem:[#allocation5] sm:$0xff] %v289
    %s291 = scalar_lea.vmem [#allocation2], 8
    %v292 = vld [vmem:[%s291] sm:$0xff]
    %v294 = vcombine.high %v292, %v292
    %296 = vmatprep.subr.mxu0 0.0
    %297 = vmatpush1.msra.mxu0 1.0
    %298 = vmatprep.subr.mxu0 0.0
    %299 = vmatpush1.msra.mxu0 1.0
    %300 = vmatprep.subr.mxu0 0.0
    %301 = vmatpush1.msra.mxu0 1.0
    %302 = vmatprep.subr.mxu0 0.0
    %303 = vmatpush1.msra.mxu0 1.0
    %304 = vmatprep.subr.mxu0 0.0
    %305 = vmatpush1.msra.mxu0 1.0
    %306 = vmatprep.subr.mxu0 0.0
    %307 = vmatpush1.msra.mxu0 1.0
    %308 = vmatprep.subr.mxu0 0.0
    %309 = vmatpush1.msra.mxu0 1.0
    %310 = vmatprep.subr.mxu0 0.0
    %311 = vmatpush1.msra.mxu0 1.0
    %312 = vmatprep.subr.mxu0 0.0
    %313 = vmatpush1.msra.mxu0 1.0
    %314 = vmatprep.subr.mxu0 0.0
    %315 = vmatpush1.msra.mxu0 1.0
    %316 = vmatprep.subr.mxu0 0.0
    %317 = vmatpush1.msra.mxu0 1.0
    %318 = vmatprep.subr.mxu0 0.0
    %319 = vmatpush1.msra.mxu0 1.0
    %320 = vmatprep.subr.mxu0 0.0
    %321 = vmatpush1.msra.mxu0 1.0
    %322 = vmatprep.subr.mxu0 0.0
    %323 = vmatpush1.msra.mxu0 1.0
    %324 = vmatprep.subr.mxu0 0.0
    %325 = vmatpush1.msra.mxu0 1.0
    %326 = vmatprep.subr.mxu0 0.0
    %327 = vmatpush1.msra.mxu0 1.0
    %328 = vmatprep.subr.mxu0 0.0
    %329 = vmatpush1.msra.mxu0 1.0
    %330 = vmatprep.subr.mxu0 0.0
    %331 = vmatpush1.msra.mxu0 1.0
    %332 = vmatprep.subr.mxu0 0.0
    %333 = vmatpush1.msra.mxu0 1.0
    %334 = vmatprep.subr.mxu0 0.0
    %335 = vmatpush1.msra.mxu0 1.0
    %336 = vmatprep.subr.mxu0 0.0
    %337 = vmatpush1.msra.mxu0 1.0
    %338 = vmatprep.subr.mxu0 0.0
    %339 = vmatpush1.msra.mxu0 1.0
    %340 = vmatprep.subr.mxu0 0.0
    %341 = vmatpush1.msra.mxu0 1.0
    %342 = vmatprep.subr.mxu0 0.0
    %343 = vmatpush1.msra.mxu0 1.0
    %344 = vmatprep.subr.mxu0 0.0
    %345 = vmatpush1.msra.mxu0 1.0
    %346 = vmatprep.subr.mxu0 0.0
    %347 = vmatpush1.msra.mxu0 1.0
    %348 = vmatprep.subr.mxu0 0.0
    %349 = vmatpush1.msra.mxu0 1.0
    %350 = vmatprep.subr.mxu0 0.0
    %351 = vmatpush1.msra.mxu0 1.0
    %352 = vmatprep.subr.mxu0 0.0
    %353 = vmatpush1.msra.mxu0 1.0
    %354 = vmatprep.subr.mxu0 0.0
    %355 = vmatpush1.msra.mxu0 1.0
    %356 = vmatprep.subr.mxu0 0.0
    %357 = vmatpush1.msra.mxu0 1.0
    %358 = vmatprep.subr.mxu0 0.0
    %359 = vmatpush1.msra.mxu0 1.0
    %360 = vmatprep.mubr.f32.mxu0 %v294
    %361 = vmatmul.mubr.f32.gmra.mrb[0].mxu0 %v292
    %v362 = vpop.f32.mrb[0].mxu0
    %v363 = vadd.f32 0.0, %v362
    %v364 = vpop.f32.mrb[0].mxu0
    %365 = vdwg.mxu0
    %v366 = vmul.f32 %v363, 0.00390625
    %v367 = vld [vmem:[%s1] sm:$0x3]
    %v368 = vld [vmem:[%s2] sm:$0x3]
    %v370 = vsel %vm112, %v367, 0
    %v373 = vsel %vm116, %v366, 0
    %375 = vmatprep.subr.mxu0 0.0
    %376 = vmatpush1.msra.mxu0 %v373
    %377 = vmatprep.subr.mxu0 0.0
    %378 = vmatpush1.msra.mxu0 0.0
    %379 = vmatprep.subr.mxu0 0.0
    %380 = vmatpush1.msra.mxu0 0.0
    %381 = vmatprep.subr.mxu0 0.0
    %382 = vmatpush1.msra.mxu0 0.0
    %383 = vmatprep.subr.mxu0 0.0
    %384 = vmatpush1.msra.mxu0 0.0
    %385 = vmatprep.subr.mxu0 0.0
    %386 = vmatpush1.msra.mxu0 0.0
    %387 = vmatprep.subr.mxu0 0.0
    %388 = vmatpush1.msra.mxu0 0.0
    %389 = vmatprep.subr.mxu0 0.0
    %390 = vmatpush1.msra.mxu0 0.0
    %391 = vmatprep.subr.mxu0 0.0
    %392 = vmatpush1.msra.mxu0 0.0
    %393 = vmatprep.subr.mxu0 0.0
    %394 = vmatpush1.msra.mxu0 0.0
    %395 = vmatprep.subr.mxu0 0.0
    %396 = vmatpush1.msra.mxu0 0.0
    %397 = vmatprep.subr.mxu0 0.0
    %398 = vmatpush1.msra.mxu0 0.0
    %399 = vmatprep.subr.mxu0 0.0
    %400 = vmatpush1.msra.mxu0 0.0
    %401 = vmatprep.subr.mxu0 0.0
    %402 = vmatpush1.msra.mxu0 0.0
    %403 = vmatprep.subr.mxu0 0.0
    %404 = vmatpush1.msra.mxu0 0.0
    %405 = vmatprep.subr.mxu0 0.0
    %406 = vmatpush1.msra.mxu0 0.0
    %407 = vmatprep.subr.mxu0 0.0
    %408 = vmatpush1.msra.mxu0 0.0
    %409 = vmatprep.subr.mxu0 0.0
    %410 = vmatpush1.msra.mxu0 0.0
    %411 = vmatprep.subr.mxu0 0.0
    %412 = vmatpush1.msra.mxu0 0.0
    %413 = vmatprep.subr.mxu0 0.0
    %414 = vmatpush1.msra.mxu0 0.0
    %415 = vmatprep.subr.mxu0 0.0
    %416 = vmatpush1.msra.mxu0 0.0
    %417 = vmatprep.subr.mxu0 0.0
    %418 = vmatpush1.msra.mxu0 0.0
    %419 = vmatprep.subr.mxu0 0.0
    %420 = vmatpush1.msra.mxu0 0.0
    %421 = vmatprep.subr.mxu0 0.0
    %422 = vmatpush1.msra.mxu0 0.0
    %423 = vmatprep.subr.mxu0 0.0
    %424 = vmatpush1.msra.mxu0 0.0
    %425 = vmatprep.subr.mxu0 0.0
    %426 = vmatpush1.msra.mxu0 0.0
    %427 = vmatprep.subr.mxu0 0.0
    %428 = vmatpush1.msra.mxu0 0.0
    %429 = vmatprep.subr.mxu0 0.0
    %430 = vmatpush1.msra.mxu0 0.0
    %431 = vmatprep.subr.mxu0 0.0
    %432 = vmatpush1.msra.mxu0 0.0
    %433 = vmatprep.subr.mxu0 0.0
    %434 = vmatpush1.msra.mxu0 0.0
    %435 = vmatprep.subr.mxu0 0.0
    %436 = vmatpush1.msra.mxu0 0.0
    %437 = vmatprep.subr.mxu0 0.0
    %438 = vmatpush1.msra.mxu0 0.0
    %439 = vmatprep.mubr.f32.mxu0 0.0
    %440 = vmatmul.mubr.f32.gmra.mrb[0].mxu0 %v370
    %v441 = vpop.f32.mrb[0].mxu0
    %v442 = vadd.f32 %v368, %v441
    %v443 = vpop.f32.mrb[0].mxu0
    %444 = vdwg.mxu0
    %v445 = vmax.f32 %v442, 0.0
    %v446 = vld [vmem:[%s3] sm:$0xf]
    %v447 = vld [vmem:[%s4] sm:$0xf]
    %v449 = vsel %vm193, %v446, 0
    %v452 = vsel %vm197, %v445, 0
    %454 = vmatprep.subr.mxu0 0.0
    %455 = vmatpush1.msra.mxu0 %v452
    %456 = vmatprep.subr.mxu0 0.0
    %457 = vmatpush1.msra.mxu0 0.0
    %458 = vmatprep.subr.mxu0 0.0
    %459 = vmatpush1.msra.mxu0 0.0
    %460 = vmatprep.subr.mxu0 0.0
    %461 = vmatpush1.msra.mxu0 0.0
    %462 = vmatprep.subr.mxu0 0.0
    %463 = vmatpush1.msra.mxu0 0.0
    %464 = vmatprep.subr.mxu0 0.0
    %465 = vmatpush1.msra.mxu0 0.0
    %466 = vmatprep.subr.mxu0 0.0
    %467 = vmatpush1.msra.mxu0 0.0
    %468 = vmatprep.subr.mxu0 0.0
    %469 = vmatpush1.msra.mxu0 0.0
    %470 = vmatprep.subr.mxu0 0.0
    %471 = vmatpush1.msra.mxu0 0.0
    %472 = vmatprep.subr.mxu0 0.0
    %473 = vmatpush1.msra.mxu0 0.0
    %474 = vmatprep.subr.mxu0 0.0
    %475 = vmatpush1.msra.mxu0 0.0
    %476 = vmatprep.subr.mxu0 0.0
    %477 = vmatpush1.msra.mxu0 0.0
    %478 = vmatprep.subr.mxu0 0.0
    %479 = vmatpush1.msra.mxu0 0.0
    %480 = vmatprep.subr.mxu0 0.0
    %481 = vmatpush1.msra.mxu0 0.0
    %482 = vmatprep.subr.mxu0 0.0
    %483 = vmatpush1.msra.mxu0 0.0
    %484 = vmatprep.subr.mxu0 0.0
    %485 = vmatpush1.msra.mxu0 0.0
    %486 = vmatprep.subr.mxu0 0.0
    %487 = vmatpush1.msra.mxu0 0.0
    %488 = vmatprep.subr.mxu0 0.0
    %489 = vmatpush1.msra.mxu0 0.0
    %490 = vmatprep.subr.mxu0 0.0
    %491 = vmatpush1.msra.mxu0 0.0
    %492 = vmatprep.subr.mxu0 0.0
    %493 = vmatpush1.msra.mxu0 0.0
    %494 = vmatprep.subr.mxu0 0.0
    %495 = vmatpush1.msra.mxu0 0.0
    %496 = vmatprep.subr.mxu0 0.0
    %497 = vmatpush1.msra.mxu0 0.0
    %498 = vmatprep.subr.mxu0 0.0
    %499 = vmatpush1.msra.mxu0 0.0
    %500 = vmatprep.subr.mxu0 0.0
    %501 = vmatpush1.msra.mxu0 0.0
    %502 = vmatprep.subr.mxu0 0.0
    %503 = vmatpush1.msra.mxu0 0.0
    %504 = vmatprep.subr.mxu0 0.0
    %505 = vmatpush1.msra.mxu0 0.0
    %506 = vmatprep.subr.mxu0 0.0
    %507 = vmatpush1.msra.mxu0 0.0
    %508 = vmatprep.subr.mxu0 0.0
    %509 = vmatpush1.msra.mxu0 0.0
    %510 = vmatprep.subr.mxu0 0.0
    %511 = vmatpush1.msra.mxu0 0.0
    %512 = vmatprep.subr.mxu0 0.0
    %513 = vmatpush1.msra.mxu0 0.0
    %514 = vmatprep.subr.mxu0 0.0
    %515 = vmatpush1.msra.mxu0 0.0
    %516 = vmatprep.subr.mxu0 0.0
    %517 = vmatpush1.msra.mxu0 0.0
    %518 = vmatprep.mubr.f32.mxu0 0.0
    %519 = vmatmul.mubr.f32.gmra.mrb[0].mxu0 %v449
    %v520 = vpop.f32.mrb[0].mxu0
    %v521 = vadd.f32 %v447, %v520
    %v522 = vpop.f32.mrb[0].mxu0
    %523 = vdwg.mxu0
    %v524 = vxor.u32 %v521, 2147483648
    %v525 = vmul.f32 %v524, 1.442695
    %v526 = vpow.pop %v525
    %v527 = vadd.f32 %v526, 1.0
    %v528 = vrcp.pop %v527
    %v529 = vmul.f32 1.0, %v528
    %531 = vset.pattern.permute.xlu0 0
    %532 = vperm.xlu0 %531, %v529
    %v533 = vpop.permute.xlu0 %532
    %v535 = vunpack.c.l.s4 839922192
    %v536 = vunpack.c.0.s8 %v535
    %v537 = vlaneseq
    %v538 = vshrl.u32 %v537, 7
    %v539 = vsub.s32 %v536, %v538
    %v540 = vrot.slane %v533, %v539
    %v542 = vmul.f32 %v292, %v540
    %s543 = scalar_lea.vmem [#allocation5], 8
    %544 = vst [vmem:[%s543] sm:$0xff] %v542
    // Predicated region
    $region26: #{tpu_custom_call.1} parent=1 // pred_check
      _
    $region27: #{tpu_custom_call.1} parent=1 // pred_check_branch
      %546 = sbr.rel (0) target = $region29
    $region28: #{tpu_custom_call.1} parent=1 // pred_region
      %s548 = ssub.s32 256, 256
      %549 = vsyncadd [#allocation4], %s548
      %s550 = sshll.u32 [#allocation5], 4
      %s551 = int_to_ptr.vmem [resolvable:$true] %s550
      %556 = dma.vmem_to_hbm [thread:$0]  %s551, 256, %s5, [#allocation4], 128, 128, 8
    $region29: #{tpu_custom_call.1} parent=1 // pred_fallthru
      _
    // Predicated region
    $region30: #{tpu_custom_call.1} parent=1 // pred_check
      _
    $region31: #{tpu_custom_call.1} parent=1 // pred_check_branch
      %558 = sbr.rel (0) target = $region33
    $region32: #{tpu_custom_call.1} parent=1 // pred_region
      %559 = dma.done [#allocation4], 256
    $region33: #{tpu_custom_call.1} parent=1 // pred_fallthru
      _
    %560 = vsyncpa [#allocation3], 1
    %561 = vsyncpa [#allocation4], 1

</llo_original>
